<compile_context>
chip_gen: v7x
topology: tpu7x:2x2x1
jax: 0.10.0
libtpu: 0.0.40
codegen_flags: <defaults>
</compile_context>

<pallas_src>
import jax
import jax.numpy as jnp
from jax.experimental import pallas as pl
from jax.experimental.pallas import tpu as pltpu


_LANE = 128
_SUBLANE = 8
_SLAB_W = 8 * _LANE              # 1024-wide slab rows -> 4 KiB contiguous per row
_MAX_BLOCK_ROWS = 512            # (512, 1024) f32 tile = 2 MiB
_VMEM_LIMIT_BYTES = 32 * 1024 * 1024   # explicit headroom for double-buffered I/O


def _linear_1x1_kernel(x_ref, w_ref, b_ref, o_ref):
    # x_ref / o_ref: (block_rows, 1024) VMEM tiles (lane-dense slab).
    # w_ref / b_ref: (1,) float32 SMEM scalars -> read on the scalar path.
    w = w_ref[0]
    b = b_ref[0]
    # Pure VPU elementwise multiply-add; equivalent to x @ W^T + b for 1x1.
    o_ref[...] = (x_ref[...].astype(jnp.float32) * w + b).astype(o_ref.dtype)


def _choose_block_rows(rows_needed):
    """Pick a power-of-two block_rows in [8, 512].

    Prefer >= 8 grid programs while tiles stay >= 64 rows (256 KiB), and
    always give >= 2 programs (both v7x TensorCores) when there is enough
    work; for tiny inputs fall back to a single block.
    """
    block_rows = _MAX_BLOCK_ROWS
    while block_rows > 64 and pl.cdiv(rows_needed, block_rows) < 8:
        block_rows //= 2
    while block_rows > _SUBLANE and pl.cdiv(rows_needed, block_rows) < 2:
        block_rows //= 2
    return block_rows


def net_forward(x, weight, bias):
    """Pallas equivalent of Net.forward: Linear(1, 1) applied to x of shape (N, 1).

    Args:
      x:      (N, 1) float32
      weight: (1, 1) float32  (PyTorch Linear.weight, shape (out, in))
      bias:   (1,)   float32  (PyTorch Linear.bias)
    Returns:
      (N, 1) float32
    """
    n = x.shape[0]
    dtype = x.dtype

    # Lane-dense slab: (N,) -> pad -> (rows, 1024).
    rows_needed = max(1, pl.cdiv(n, _SLAB_W))
    block_rows = _choose_block_rows(rows_needed)
    rows = pl.cdiv(rows_needed, block_rows) * block_rows
    padded = rows * _SLAB_W

    x_flat = x.reshape(-1)
    if padded != n:
        # Shape plumbing only; fuses with neighbours under jax.jit.
        x_flat = jnp.pad(x_flat, (0, padded - n))
    x_slab = x_flat.reshape(rows, _SLAB_W)

    # weight / bias always go to SMEM as float32 scalars (robust even if the
    # activation dtype is sub-32-bit); cast back happens inside the kernel.
    w_s = weight.reshape(1).astype(jnp.float32)
    b_s = bias.reshape(1).astype(jnp.float32)

    grid = (rows // block_rows,)
    itemsize = jnp.dtype(dtype).itemsize

    y_slab = pl.pallas_call(
        _linear_1x1_kernel,
        out_shape=jax.ShapeDtypeStruct((rows, _SLAB_W), dtype),
        grid=grid,
        in_specs=[
            pl.BlockSpec((block_rows, _SLAB_W), lambda i: (i, 0)),
            pl.BlockSpec(memory_space=pltpu.MemorySpace.SMEM),
            pl.BlockSpec(memory_space=pltpu.MemorySpace.SMEM),
        ],
        out_specs=pl.BlockSpec((block_rows, _SLAB_W), lambda i: (i, 0)),
        compiler_params=pltpu.CompilerParams(
            dimension_semantics=("parallel",),
            vmem_limit_bytes=_VMEM_LIMIT_BYTES),
        cost_estimate=pl.CostEstimate(
            flops=2 * padded,                      # one mul + one add per element
            transcendentals=0,
            bytes_accessed=2 * padded * itemsize + 8),
    )(x_slab, w_s, b_s)

    # Drop padding and restore the (N, 1) PyTorch output layout.
    y_flat = y_slab.reshape(-1)
    if padded != n:
        y_flat = y_flat[:n]
    return y_flat.reshape(n, 1)


if __name__ == "__main__":
    key = jax.random.PRNGKey(0)
    kx, kw, kb = jax.random.split(key, 3)

    # Small, deterministic shapes consistent with Linear(1, 1): batch = 8.
    # NOTE: at N=8 a standalone pallas_call is launch-overhead dominated; in a
    # real model this op should be fused into its consumer (plain x * w + b).
    N = 8
    x = jax.random.normal(kx, (N, 1), dtype=jnp.float32)

    # Deterministic parameter init (synthetic, not a checkpoint load).
    weight = jax.random.normal(kw, (1, 1), dtype=jnp.float32)  # (out, in)
    bias = jax.random.normal(kb, (1,), dtype=jnp.float32)

    fwd = jax.jit(net_forward)          # jit so wrapper pad/slice fuse away
    y = jax.block_until_ready(fwd(x, weight, bias))

    # Reference: y = x @ W^T + b
    y_ref = x @ weight.T + bias
    assert y.shape == (N, 1)
    assert jnp.allclose(y, y_ref, atol=1e-6, rtol=1e-6)

    print("KERNEL_OK")
</pallas_src>

<mosaic_0001>
module attributes {stable_mosaic.version = 11 : i64} {
  func.func @_linear_1x1_kernel(%arg0: i32, %arg1: memref<8x1024xf32, #tpu.memory_space<vmem>>, %arg2: memref<1xf32, #tpu.memory_space<smem>>, %arg3: memref<1xf32, #tpu.memory_space<smem>>, %arg4: memref<8x1024xf32, #tpu.memory_space<vmem>>) attributes {dimension_semantics = [#tpu.dimension_semantics<parallel>], iteration_bounds = array<i64: 1>, scalar_prefetch = 0 : i64, scratch_operands = 0 : i64, tpu.core_type = #tpu.core_type<tc>, window_params = [{transform_indices = @transform_0, window_bounds = array<i64: 8, 1024>}, {transform_indices = @transform_1, window_bounds = array<i64: 1>}, {transform_indices = @transform_2, window_bounds = array<i64: 1>}, {transform_indices = @transform_3, window_bounds = array<i64: 8, 1024>}]} {
    %c0 = arith.constant 0 : index
    %0 = memref.load %arg2[%c0] : memref<1xf32, #tpu.memory_space<smem>>
    %c0_0 = arith.constant 0 : index
    %1 = memref.load %arg3[%c0_0] : memref<1xf32, #tpu.memory_space<smem>>
    %c0_1 = arith.constant 0 : index
    %c0_2 = arith.constant 0 : index
    %2 = vector.load %arg1[%c0_1, %c0_2] : memref<8x1024xf32, #tpu.memory_space<vmem>>, vector<8x1024xf32>
    %3 = vector.broadcast %0 : f32 to vector<8x1024xf32>
    %4 = arith.mulf %2, %3 : vector<8x1024xf32>
    %5 = vector.broadcast %1 : f32 to vector<8x1024xf32>
    %6 = arith.addf %4, %5 : vector<8x1024xf32>
    %c0_3 = arith.constant 0 : index
    %c0_4 = arith.constant 0 : index
    %7 = vector.load %arg4[%c0_3, %c0_4] : memref<8x1024xf32, #tpu.memory_space<vmem>>, vector<8x1024xf32>
    tpu.vector_store %arg4[%c0_3, %c0_4], %6 {strides = array<i32>} : memref<8x1024xf32, #tpu.memory_space<vmem>>, vector<8x1024xf32>,
    return
  }
  func.func @transform_0(%arg0: i32) -> (i32, i32) {
    %c0_i32 = arith.constant 0 : i32
    %c0_i32_0 = arith.constant 0 : i32
    return %arg0, %c0_i32 : i32, i32
  }
  func.func @transform_1(%arg0: i32) -> i32 {
    %c0_i32 = arith.constant 0 : i32
    %c0_i32_0 = arith.constant 0 : i32
    return %c0_i32 : i32
  }
  func.func @transform_2(%arg0: i32) -> i32 {
    %c0_i32 = arith.constant 0 : i32
    %c0_i32_0 = arith.constant 0 : i32
    return %c0_i32 : i32
  }
  func.func @transform_3(%arg0: i32) -> (i32, i32) {
    %c0_i32 = arith.constant 0 : i32
    %c0_i32_0 = arith.constant 0 : i32
    return %arg0, %c0_i32 : i32, i32
  }
}

</mosaic_0001>

<llo_original>
// kernel: net_forward.1
$region0: #{net_forward.1}
  #allocation0 [shape = 'u32[]', space=smem, size = 0x4, offset = 0x4, fixed_abs, tag = 'smem constant byte address 0x4 - core index']
  #allocation1 [shape = 'u32[144,128]{1,0:T(1,128)}', space=vmem, size = 0x12000, scoped, tag = 'internal scratch']
  #allocation2 [shape = 'f32[1]{0:T(128)S(6)}', space=smem, size = 0x200, scoped, tag = 'scoped memory for net_forward.1']
  #allocation3 [shape = 'f32[1]{0:T(128)S(6)}', space=smem, size = 0x200, scoped, tag = 'scoped memory for net_forward.1']
  %s0 = inlined_call_operand.vmem [shape: f32[8,1024], index: 0, kind: input, shape index: {}]
  %s1 = inlined_call_operand.<no memory space> [shape: f32[1], index: 1, kind: input, shape index: {}]
  %s2 = inlined_call_operand.<no memory space> [shape: f32[1], index: 2, kind: input, shape index: {}]
  %s3 = inlined_call_operand.vmem [shape: f32[8,1024], index: 3, kind: output, shape index: {}]
  %s4 = sld [smem:[#allocation0]]
  $region22: #{net_forward.1} parent=0
    _
  %s6 = ssub.s32 1, %s4
  %s7 = scalar_select 0, %s6, %s4
  %8 = sst [smem:[#allocation2]] %s1
  %9 = sst [smem:[#allocation3]] %s2
  // Predicated region
  $region2: #{net_forward.1} parent=0 // pred_check
    _
  $region3: #{net_forward.1} parent=0 // pred_check_branch
    %11 = sbr.rel (0) target = $region5
  $region4: #{net_forward.1} parent=0 // pred_region
    _
  $region5: #{net_forward.1} parent=0 // pred_fallthru
    _
  // Predicated region
  $region6: #{net_forward.1} parent=0 // pred_check
    _
  $region7: #{net_forward.1} parent=0 // pred_check_branch
    %13 = sbr.rel (0) target = $region9
  $region8: #{net_forward.1} parent=0 // pred_region
    _
  $region9: #{net_forward.1} parent=0 // pred_fallthru
    _
  // Predicated region
  $region10: #{net_forward.1} parent=0 // pred_check
    _
  $region11: #{net_forward.1} parent=0 // pred_check_branch
    %15 = sbr.rel (0) target = $region13
  $region12: #{net_forward.1} parent=0 // pred_region
    _
  $region13: #{net_forward.1} parent=0 // pred_fallthru
    _
  %s16 = sld [smem:[#allocation2]]
  %s17 = sld [smem:[#allocation3]]
  %v18 = vld [vmem:[%s0] sm:$0xff]
  %v19 = vld [vmem:[%s0 + $0x8] sm:$0xff]
  %v20 = vld [vmem:[%s0 + $0x10] sm:$0xff]
  %v21 = vld [vmem:[%s0 + $0x18] sm:$0xff]
  %v22 = vld [vmem:[%s0 + $0x20] sm:$0xff]
  %v23 = vld [vmem:[%s0 + $0x28] sm:$0xff]
  %v24 = vld [vmem:[%s0 + $0x30] sm:$0xff]
  %v25 = vld [vmem:[%s0 + $0x38] sm:$0xff]
  %v26 = vstv %s16
  %v27 = vmul.f32 %v18, %v26
  %v28 = vmul.f32 %v19, %v26
  %v29 = vmul.f32 %v20, %v26
  %v30 = vmul.f32 %v21, %v26
  %v31 = vmul.f32 %v22, %v26
  %v32 = vmul.f32 %v23, %v26
  %v33 = vmul.f32 %v24, %v26
  %v34 = vmul.f32 %v25, %v26
  %v35 = vstv %s17
  %v36 = vadd.f32 %v27, %v35
  %v37 = vadd.f32 %v28, %v35
  %v38 = vadd.f32 %v29, %v35
  %v39 = vadd.f32 %v30, %v35
  %v40 = vadd.f32 %v31, %v35
  %v41 = vadd.f32 %v32, %v35
  %v42 = vadd.f32 %v33, %v35
  %v43 = vadd.f32 %v34, %v35
  %44 = vst [vmem:[%s3] sm:$0xff] %v36
  %45 = vst [vmem:[%s3 + $0x8] sm:$0xff] %v37
  %46 = vst [vmem:[%s3 + $0x10] sm:$0xff] %v38
  %47 = vst [vmem:[%s3 + $0x18] sm:$0xff] %v39
  %48 = vst [vmem:[%s3 + $0x20] sm:$0xff] %v40
  %49 = vst [vmem:[%s3 + $0x28] sm:$0xff] %v41
  %50 = vst [vmem:[%s3 + $0x30] sm:$0xff] %v42
  %51 = vst [vmem:[%s3 + $0x38] sm:$0xff] %v43
  // Predicated region
  $region14: #{net_forward.1} parent=0 // pred_check
    _
  $region15: #{net_forward.1} parent=0 // pred_check_branch
    %53 = sbr.rel (0) target = $region17
  $region16: #{net_forward.1} parent=0 // pred_region
    _
  $region17: #{net_forward.1} parent=0 // pred_fallthru
    _
  // Predicated region
  $region18: #{net_forward.1} parent=0 // pred_check
    _
  $region19: #{net_forward.1} parent=0 // pred_check_branch
    %55 = sbr.rel (0) target = $region21
  $region20: #{net_forward.1} parent=0 // pred_region
    _
  $region21: #{net_forward.1} parent=0 // pred_fallthru
    _

</llo_original>
